<compile_context>
chip_gen: v7x
topology: tpu7x:2x2x1
jax: 0.10.0
libtpu: 0.0.40
codegen_flags: <defaults>
</compile_context>

<pallas_src>
import jax
import jax.numpy as jnp
from jax.experimental import pallas as pl
from jax.experimental.pallas import tpu as pltpu

INPUT_SIZE = 10
HIDDEN_SIZE = 5
OUTPUT_SIZE = 2

_LANE = 128          # lane width: batch tiles must be multiples of this
_MAX_TB = 512        # batch-tile (lane) size; ~85% of HBM roofline at >=512


def _round_up(n, m):
    return ((n + m - 1) // m) * m


def _ffn_kernel(xT_ref, w1_ref, b1_ref, w2_ref, b2_ref, oT_ref):
    # xT_ref: [INPUT, TB]  (batch on lanes)   w1_ref: [HIDDEN, INPUT]
    # b1_ref: [HIDDEN, 1]                      w2_ref: [OUTPUT, HIDDEN]
    # b2_ref: [OUTPUT, 1]                      oT_ref: [OUTPUT, TB]
    xT = xT_ref[...]
    h = jnp.dot(w1_ref[...], xT, preferred_element_type=jnp.float32)   # [H, TB]
    h = jnp.maximum(h + b1_ref[...], 0.0)                              # ReLU
    o = jnp.dot(w2_ref[...], h, preferred_element_type=jnp.float32)    # [O, TB]
    oT_ref[...] = (o + b2_ref[...]).astype(oT_ref.dtype)


def feed_forward_network(x, w1, b1, w2, b2):
    """Fused FFN forward.

    x : [B, INPUT_SIZE]
    w1: [HIDDEN_SIZE, INPUT_SIZE]   (PyTorch Linear layout, [out, in])
    b1: [HIDDEN_SIZE]
    w2: [OUTPUT_SIZE, HIDDEN_SIZE]
    b2: [OUTPUT_SIZE]
    returns [B, OUTPUT_SIZE]
    """
    B = x.shape[0]
    dtype = x.dtype
    itemsize = jnp.dtype(dtype).itemsize

    # Batch tile: lane axis must be a multiple of 128; cap at _MAX_TB.
    TB = min(_MAX_TB, _round_up(B, _LANE))
    B_pad = _round_up(B, TB)
    n_tiles = B_pad // TB

    # Present batch on the lane axis; zero-pad the tail (padded columns only
    # ever see the biases and are sliced away below).
    xT = jnp.pad(x.T, ((0, 0), (0, B_pad - B)))                  # [INPUT, B_pad]
    b1c = b1.reshape(HIDDEN_SIZE, 1).astype(dtype)
    b2c = b2.reshape(OUTPUT_SIZE, 1).astype(dtype)

    cost = pl.CostEstimate(
        flops=2 * B_pad * (INPUT_SIZE * HIDDEN_SIZE + HIDDEN_SIZE * OUTPUT_SIZE),
        transcendentals=0,
        bytes_accessed=itemsize * (xT.size + w1.size + b1.size + w2.size
                                   + b2.size + OUTPUT_SIZE * B_pad),
    )

    oT = pl.pallas_call(
        _ffn_kernel,
        out_shape=jax.ShapeDtypeStruct((OUTPUT_SIZE, B_pad), dtype),
        grid=(n_tiles,),
        in_specs=[
            # x tiles stream along the lane (batch) axis.
            pl.BlockSpec((INPUT_SIZE, TB), lambda i: (0, i)),
            # Weights / biases: constant block index -> resident in VMEM.
            pl.BlockSpec((HIDDEN_SIZE, INPUT_SIZE), lambda i: (0, 0)),
            pl.BlockSpec((HIDDEN_SIZE, 1), lambda i: (0, 0)),
            pl.BlockSpec((OUTPUT_SIZE, HIDDEN_SIZE), lambda i: (0, 0)),
            pl.BlockSpec((OUTPUT_SIZE, 1), lambda i: (0, 0)),
        ],
        out_specs=pl.BlockSpec((OUTPUT_SIZE, TB), lambda i: (0, i)),
        compiler_params=pltpu.CompilerParams(
            dimension_semantics=("parallel",)),
        cost_estimate=cost,
    )(xT, w1.astype(dtype), b1c, w2.astype(dtype), b2c)

    return oT[:, :B].T                                           # [B, OUTPUT]


def _reference(x, w1, b1, w2, b2):
    h = jnp.maximum(x @ w1.T + b1, 0.0)
    return h @ w2.T + b2


if __name__ == "__main__":
    key = jax.random.PRNGKey(0)
    kx, kx2, k1, kb1, k2, kb2 = jax.random.split(key, 6)

    # PyTorch-style params: uniform(-1/sqrt(fan_in), +1/sqrt(fan_in)).
    bound1 = 1.0 / (INPUT_SIZE ** 0.5)
    w1 = jax.random.uniform(k1, (HIDDEN_SIZE, INPUT_SIZE), dtype=jnp.float32,
                            minval=-bound1, maxval=bound1)
    b1 = jax.random.uniform(kb1, (HIDDEN_SIZE,), dtype=jnp.float32,
                            minval=-bound1, maxval=bound1)
    bound2 = 1.0 / (HIDDEN_SIZE ** 0.5)
    w2 = jax.random.uniform(k2, (OUTPUT_SIZE, HIDDEN_SIZE), dtype=jnp.float32,
                            minval=-bound2, maxval=bound2)
    b2 = jax.random.uniform(kb2, (OUTPUT_SIZE,), dtype=jnp.float32,
                            minval=-bound2, maxval=bound2)

    # 1) Spec shape: x = torch.rand(1, input_size)  (single 128-lane tile).
    x_small = jax.random.uniform(kx, (1, INPUT_SIZE), dtype=jnp.float32)
    out_small = jax.block_until_ready(feed_forward_network(x_small, w1, b1, w2, b2))
    ref_small = _reference(x_small, w1, b1, w2, b2)
    assert out_small.shape == (1, OUTPUT_SIZE), out_small.shape
    assert jnp.allclose(out_small, ref_small, atol=1e-5, rtol=1e-5), (out_small, ref_small)

    # 2) Batched shape exercising the tiled/pipelined path (2 grid steps).
    B_big = 1024
    x_big = jax.random.uniform(kx2, (B_big, INPUT_SIZE), dtype=jnp.float32)
    out_big = jax.block_until_ready(feed_forward_network(x_big, w1, b1, w2, b2))
    ref_big = _reference(x_big, w1, b1, w2, b2)
    assert out_big.shape == (B_big, OUTPUT_SIZE), out_big.shape
    assert jnp.allclose(out_big, ref_big, atol=1e-5, rtol=1e-5)

    print("KERNEL_OK")
</pallas_src>

<mosaic_0001>
module attributes {stable_mosaic.version = 11 : i64} {
  func.func @_ffn_kernel(%arg0: i32, %arg1: memref<10x128xf32, #tpu.memory_space<vmem>>, %arg2: memref<5x10xf32, #tpu.memory_space<vmem>>, %arg3: memref<5x1xf32, #tpu.memory_space<vmem>>, %arg4: memref<2x5xf32, #tpu.memory_space<vmem>>, %arg5: memref<2x1xf32, #tpu.memory_space<vmem>>, %arg6: memref<2x128xf32, #tpu.memory_space<vmem>>) attributes {dimension_semantics = [#tpu.dimension_semantics<parallel>], iteration_bounds = array<i64: 1>, scalar_prefetch = 0 : i64, scratch_operands = 0 : i64, tpu.core_type = #tpu.core_type<tc>, window_params = [{transform_indices = @transform_0, window_bounds = array<i64: 10, 128>}, {pipeline_mode = #tpu.pipeline_mode<synchronous>, transform_indices = @transform_1, window_bounds = array<i64: 5, 10>}, {pipeline_mode = #tpu.pipeline_mode<synchronous>, transform_indices = @transform_2, window_bounds = array<i64: 5, 1>}, {pipeline_mode = #tpu.pipeline_mode<synchronous>, transform_indices = @transform_3, window_bounds = array<i64: 2, 5>}, {pipeline_mode = #tpu.pipeline_mode<synchronous>, transform_indices = @transform_4, window_bounds = array<i64: 2, 1>}, {transform_indices = @transform_5, window_bounds = array<i64: 2, 128>}]} {
    %c0 = arith.constant 0 : index
    %c0_0 = arith.constant 0 : index
    %0 = vector.load %arg1[%c0, %c0_0] : memref<10x128xf32, #tpu.memory_space<vmem>>, vector<10x128xf32>
    %c0_1 = arith.constant 0 : index
    %c0_2 = arith.constant 0 : index
    %1 = vector.load %arg2[%c0_1, %c0_2] : memref<5x10xf32, #tpu.memory_space<vmem>>, vector<5x10xf32>
    %cst = arith.constant dense<0.000000e+00> : vector<5x128xf32>
    %2 = tpu.matmul %1, %0, %cst {dimension_numbers = #tpu.dot_dimension_numbers<[1], [0], [0], [1], [0, 0, 1, 1], [], []>} : vector<5x10xf32>, vector<10x128xf32>, vector<5x128xf32> -> vector<5x128xf32>
    %c0_3 = arith.constant 0 : index
    %c0_4 = arith.constant 0 : index
    %3 = vector.load %arg3[%c0_3, %c0_4] : memref<5x1xf32, #tpu.memory_space<vmem>>, vector<5x1xf32>
    %4 = vector.broadcast %3 : vector<5x1xf32> to vector<5x128xf32>
    %5 = arith.addf %2, %4 : vector<5x128xf32>
    %cst_5 = arith.constant 0.000000e+00 : f32
    %6 = vector.broadcast %cst_5 : f32 to vector<5x128xf32>
    %7 = arith.maximumf %5, %6 : vector<5x128xf32>
    %c0_6 = arith.constant 0 : index
    %c0_7 = arith.constant 0 : index
    %8 = vector.load %arg4[%c0_6, %c0_7] : memref<2x5xf32, #tpu.memory_space<vmem>>, vector<2x5xf32>
    %cst_8 = arith.constant dense<0.000000e+00> : vector<2x128xf32>
    %9 = tpu.matmul %8, %7, %cst_8 {dimension_numbers = #tpu.dot_dimension_numbers<[1], [0], [0], [1], [0, 0, 1, 1], [], []>} : vector<2x5xf32>, vector<5x128xf32>, vector<2x128xf32> -> vector<2x128xf32>
    %c0_9 = arith.constant 0 : index
    %c0_10 = arith.constant 0 : index
    %10 = vector.load %arg5[%c0_9, %c0_10] : memref<2x1xf32, #tpu.memory_space<vmem>>, vector<2x1xf32>
    %11 = vector.broadcast %10 : vector<2x1xf32> to vector<2x128xf32>
    %12 = arith.addf %9, %11 : vector<2x128xf32>
    %c0_11 = arith.constant 0 : index
    %c0_12 = arith.constant 0 : index
    %13 = vector.load %arg6[%c0_11, %c0_12] : memref<2x128xf32, #tpu.memory_space<vmem>>, vector<2x128xf32>
    tpu.vector_store %arg6[%c0_11, %c0_12], %12 {strides = array<i32>} : memref<2x128xf32, #tpu.memory_space<vmem>>, vector<2x128xf32>,
    return
  }
  func.func @transform_0(%arg0: i32) -> (i32, i32) {
    %c0_i32 = arith.constant 0 : i32
    %c0_i32_0 = arith.constant 0 : i32
    return %c0_i32, %arg0 : i32, i32
  }
  func.func @transform_1(%arg0: i32) -> (i32, i32) {
    %c0_i32 = arith.constant 0 : i32
    %c0_i32_0 = arith.constant 0 : i32
    %c0_i32_1 = arith.constant 0 : i32
    return %c0_i32, %c0_i32_0 : i32, i32
  }
  func.func @transform_2(%arg0: i32) -> (i32, i32) {
    %c0_i32 = arith.constant 0 : i32
    %c0_i32_0 = arith.constant 0 : i32
    %c0_i32_1 = arith.constant 0 : i32
    return %c0_i32, %c0_i32_0 : i32, i32
  }
  func.func @transform_3(%arg0: i32) -> (i32, i32) {
    %c0_i32 = arith.constant 0 : i32
    %c0_i32_0 = arith.constant 0 : i32
    %c0_i32_1 = arith.constant 0 : i32
    return %c0_i32, %c0_i32_0 : i32, i32
  }
  func.func @transform_4(%arg0: i32) -> (i32, i32) {
    %c0_i32 = arith.constant 0 : i32
    %c0_i32_0 = arith.constant 0 : i32
    %c0_i32_1 = arith.constant 0 : i32
    return %c0_i32, %c0_i32_0 : i32, i32
  }
  func.func @transform_5(%arg0: i32) -> (i32, i32) {
    %c0_i32 = arith.constant 0 : i32
    %c0_i32_0 = arith.constant 0 : i32
    return %c0_i32, %arg0 : i32, i32
  }
}

</mosaic_0001>

<llo_original>
// kernel: tpu_custom_call.1
$region0: #{tpu_custom_call.1}
  #allocation0 [shape = 'u32[]', space=smem, size = 0x4, offset = 0x4, fixed_abs, tag = 'smem constant byte address 0x4 - core index']
  #allocation1 [shape = 'u32[144,128]{1,0:T(1,128)}', space=vmem, size = 0x12000, scoped, tag = 'internal scratch']
  %s0 = inlined_call_operand.hbm [shape: f32[10,128], index: 0, kind: input, shape index: {}]
  %s1 = inlined_call_operand.vmem [shape: f32[5,10], index: 1, kind: input, shape index: {}]
  %s2 = inlined_call_operand.vmem [shape: f32[5,1], index: 2, kind: input, shape index: {}]
  %s3 = inlined_call_operand.vmem [shape: f32[2,5], index: 3, kind: input, shape index: {}]
  %s4 = inlined_call_operand.vmem [shape: f32[2,1], index: 4, kind: input, shape index: {}]
  %s5 = inlined_call_operand.hbm [shape: f32[2,128], index: 5, kind: output, shape index: {}]
  %s6 = sld [smem:[#allocation0]]
  $region34: #{tpu_custom_call.1} parent=0
    _
  %s8 = ssub.s32 1, %s6
  %s9 = scalar_select 0, %s8, %s6
  $region1: #{tpu_custom_call.1} parent=0
    #allocation2 [shape = 'u8[8192]{0}', space=vmem, size = 0x2000, scoped, tag = 'input window, operand 0, single buffered']
    #allocation3 [shape = 's32[1]{0}', space=sflag, size = 0x4, scoped, tag = 'scoped memory for tpu_custom_call.1']
    #allocation4 [shape = 's32[1]{0}', space=sflag, size = 0x4, scoped, tag = 'scoped memory for tpu_custom_call.1']
    #allocation5 [shape = 'u8[1024]{0}', space=vmem, size = 0x400, scoped, tag = 'output window, operand 0, single buffered']
    %10 = vsyncpa [#allocation3], 0
    %11 = vsyncpa [#allocation4], 0
    // Predicated region
    $region2: #{tpu_custom_call.1} parent=1 // pred_check
      _
    $region3: #{tpu_custom_call.1} parent=1 // pred_check_branch
      %13 = sbr.rel (0) target = $region5
    $region4: #{tpu_custom_call.1} parent=1 // pred_region
      %s15 = ssub.s32 256, 256
      %16 = vsyncadd [#allocation3], %s15
      %s17 = sshll.u32 [#allocation2], 4
      %s18 = int_to_ptr.vmem [resolvable:$true] %s17
      %23 = dma.hbm_to_vmem [thread:$0]  %s0, 256, %s18, [#allocation3], 128, 128, 8
    $region5: #{tpu_custom_call.1} parent=1 // pred_fallthru
      _
    // Predicated region
    $region6: #{tpu_custom_call.1} parent=1 // pred_check
      _
    $region7: #{tpu_custom_call.1} parent=1 // pred_check_branch
      %25 = sbr.rel (0) target = $region9
    $region8: #{tpu_custom_call.1} parent=1 // pred_region
      _
    $region9: #{tpu_custom_call.1} parent=1 // pred_fallthru
      _
    // Predicated region
    $region10: #{tpu_custom_call.1} parent=1 // pred_check
      _
    $region11: #{tpu_custom_call.1} parent=1 // pred_check_branch
      %27 = sbr.rel (0) target = $region13
    $region12: #{tpu_custom_call.1} parent=1 // pred_region
      _
    $region13: #{tpu_custom_call.1} parent=1 // pred_fallthru
      _
    // Predicated region
    $region14: #{tpu_custom_call.1} parent=1 // pred_check
      _
    $region15: #{tpu_custom_call.1} parent=1 // pred_check_branch
      %29 = sbr.rel (0) target = $region17
    $region16: #{tpu_custom_call.1} parent=1 // pred_region
      _
    $region17: #{tpu_custom_call.1} parent=1 // pred_fallthru
      _
    // Predicated region
    $region18: #{tpu_custom_call.1} parent=1 // pred_check
      _
    $region19: #{tpu_custom_call.1} parent=1 // pred_check_branch
      %31 = sbr.rel (0) target = $region21
    $region20: #{tpu_custom_call.1} parent=1 // pred_region
      _
    $region21: #{tpu_custom_call.1} parent=1 // pred_fallthru
      _
    // Predicated region
    $region22: #{tpu_custom_call.1} parent=1 // pred_check
      _
    $region23: #{tpu_custom_call.1} parent=1 // pred_check_branch
      %33 = sbr.rel (0) target = $region25
    $region24: #{tpu_custom_call.1} parent=1 // pred_region
      %34 = dma.done [#allocation3], 256
    $region25: #{tpu_custom_call.1} parent=1 // pred_fallthru
      _
    %v35 = vld [vmem:[#allocation2] sm:$0xff]
    %v36 = vld [vmem:[#allocation2 + $0x8] sm:$0x3]
    %v37 = vld [vmem:[%s1] sm:$0x1f]
    %v38 = vld [vmem:[%s2] sm:$0x1f]
    %40 = vset.pattern.permute.xlu0 0
    %41 = vperm.xlu0 %40, %v38
    %v42 = vpop.permute.xlu0 %41
    %vm44 = vcmask 80896
    %v46 = vsel %vm44, %v37, 0
    %vm48 = vcmask 1041408
    %v50 = vsel %vm48, %v36, 0
    %52 = vmatprep.subr.mxu0 0.0
    %53 = vmatpush1.msra.mxu0 %v35
    %54 = vmatprep.subr.mxu0 0.0
    %55 = vmatpush1.msra.mxu0 %v50
    %56 = vmatprep.subr.mxu0 0.0
    %57 = vmatpush1.msra.mxu0 0.0
    %58 = vmatprep.subr.mxu0 0.0
    %59 = vmatpush1.msra.mxu0 0.0
    %60 = vmatprep.subr.mxu0 0.0
    %61 = vmatpush1.msra.mxu0 0.0
    %62 = vmatprep.subr.mxu0 0.0
    %63 = vmatpush1.msra.mxu0 0.0
    %64 = vmatprep.subr.mxu0 0.0
    %65 = vmatpush1.msra.mxu0 0.0
    %66 = vmatprep.subr.mxu0 0.0
    %67 = vmatpush1.msra.mxu0 0.0
    %68 = vmatprep.subr.mxu0 0.0
    %69 = vmatpush1.msra.mxu0 0.0
    %70 = vmatprep.subr.mxu0 0.0
    %71 = vmatpush1.msra.mxu0 0.0
    %72 = vmatprep.subr.mxu0 0.0
    %73 = vmatpush1.msra.mxu0 0.0
    %74 = vmatprep.subr.mxu0 0.0
    %75 = vmatpush1.msra.mxu0 0.0
    %76 = vmatprep.subr.mxu0 0.0
    %77 = vmatpush1.msra.mxu0 0.0
    %78 = vmatprep.subr.mxu0 0.0
    %79 = vmatpush1.msra.mxu0 0.0
    %80 = vmatprep.subr.mxu0 0.0
    %81 = vmatpush1.msra.mxu0 0.0
    %82 = vmatprep.subr.mxu0 0.0
    %83 = vmatpush1.msra.mxu0 0.0
    %84 = vmatprep.subr.mxu0 0.0
    %85 = vmatpush1.msra.mxu0 0.0
    %86 = vmatprep.subr.mxu0 0.0
    %87 = vmatpush1.msra.mxu0 0.0
    %88 = vmatprep.subr.mxu0 0.0
    %89 = vmatpush1.msra.mxu0 0.0
    %90 = vmatprep.subr.mxu0 0.0
    %91 = vmatpush1.msra.mxu0 0.0
    %92 = vmatprep.subr.mxu0 0.0
    %93 = vmatpush1.msra.mxu0 0.0
    %94 = vmatprep.subr.mxu0 0.0
    %95 = vmatpush1.msra.mxu0 0.0
    %96 = vmatprep.subr.mxu0 0.0
    %97 = vmatpush1.msra.mxu0 0.0
    %98 = vmatprep.subr.mxu0 0.0
    %99 = vmatpush1.msra.mxu0 0.0
    %100 = vmatprep.subr.mxu0 0.0
    %101 = vmatpush1.msra.mxu0 0.0
    %102 = vmatprep.subr.mxu0 0.0
    %103 = vmatpush1.msra.mxu0 0.0
    %104 = vmatprep.subr.mxu0 0.0
    %105 = vmatpush1.msra.mxu0 0.0
    %106 = vmatprep.subr.mxu0 0.0
    %107 = vmatpush1.msra.mxu0 0.0
    %108 = vmatprep.subr.mxu0 0.0
    %109 = vmatpush1.msra.mxu0 0.0
    %110 = vmatprep.subr.mxu0 0.0
    %111 = vmatpush1.msra.mxu0 0.0
    %112 = vmatprep.subr.mxu0 0.0
    %113 = vmatpush1.msra.mxu0 0.0
    %114 = vmatprep.subr.mxu0 0.0
    %115 = vmatpush1.msra.mxu0 0.0
    %116 = vmatprep.mubr.f32.mxu0 0.0
    %117 = vmatmul.mubr.f32.gmra.mrb[0].mxu0 %v46
    %v118 = vpop.f32.mrb[0].mxu0
    %v119 = vadd.f32 %v42, %v118
    %v120 = vpop.f32.mrb[0].mxu0
    %121 = vdwg.mxu0
    %v122 = vmax.f32 %v119, 0.0
    %v123 = vld [vmem:[%s3] sm:$0x3]
    %v124 = vld [vmem:[%s4] sm:$0x3]
    %126 = vset.pattern.permute.xlu0 0
    %127 = vperm.xlu0 %126, %v124
    %v128 = vpop.permute.xlu0 %127
    %vm130 = vcmask 39936
    %v132 = vsel %vm130, %v123, 0
    %vm134 = vcmask 1044480
    %v136 = vsel %vm134, %v122, 0
    %138 = vmatprep.subr.mxu0 0.0
    %139 = vmatpush1.msra.mxu0 %v136
    %140 = vmatprep.subr.mxu0 0.0
    %141 = vmatpush1.msra.mxu0 0.0
    %142 = vmatprep.subr.mxu0 0.0
    %143 = vmatpush1.msra.mxu0 0.0
    %144 = vmatprep.subr.mxu0 0.0
    %145 = vmatpush1.msra.mxu0 0.0
    %146 = vmatprep.subr.mxu0 0.0
    %147 = vmatpush1.msra.mxu0 0.0
    %148 = vmatprep.subr.mxu0 0.0
    %149 = vmatpush1.msra.mxu0 0.0
    %150 = vmatprep.subr.mxu0 0.0
    %151 = vmatpush1.msra.mxu0 0.0
    %152 = vmatprep.subr.mxu0 0.0
    %153 = vmatpush1.msra.mxu0 0.0
    %154 = vmatprep.subr.mxu0 0.0
    %155 = vmatpush1.msra.mxu0 0.0
    %156 = vmatprep.subr.mxu0 0.0
    %157 = vmatpush1.msra.mxu0 0.0
    %158 = vmatprep.subr.mxu0 0.0
    %159 = vmatpush1.msra.mxu0 0.0
    %160 = vmatprep.subr.mxu0 0.0
    %161 = vmatpush1.msra.mxu0 0.0
    %162 = vmatprep.subr.mxu0 0.0
    %163 = vmatpush1.msra.mxu0 0.0
    %164 = vmatprep.subr.mxu0 0.0
    %165 = vmatpush1.msra.mxu0 0.0
    %166 = vmatprep.subr.mxu0 0.0
    %167 = vmatpush1.msra.mxu0 0.0
    %168 = vmatprep.subr.mxu0 0.0
    %169 = vmatpush1.msra.mxu0 0.0
    %170 = vmatprep.subr.mxu0 0.0
    %171 = vmatpush1.msra.mxu0 0.0
    %172 = vmatprep.subr.mxu0 0.0
    %173 = vmatpush1.msra.mxu0 0.0
    %174 = vmatprep.subr.mxu0 0.0
    %175 = vmatpush1.msra.mxu0 0.0
    %176 = vmatprep.subr.mxu0 0.0
    %177 = vmatpush1.msra.mxu0 0.0
    %178 = vmatprep.subr.mxu0 0.0
    %179 = vmatpush1.msra.mxu0 0.0
    %180 = vmatprep.subr.mxu0 0.0
    %181 = vmatpush1.msra.mxu0 0.0
    %182 = vmatprep.subr.mxu0 0.0
    %183 = vmatpush1.msra.mxu0 0.0
    %184 = vmatprep.subr.mxu0 0.0
    %185 = vmatpush1.msra.mxu0 0.0
    %186 = vmatprep.subr.mxu0 0.0
    %187 = vmatpush1.msra.mxu0 0.0
    %188 = vmatprep.subr.mxu0 0.0
    %189 = vmatpush1.msra.mxu0 0.0
    %190 = vmatprep.subr.mxu0 0.0
    %191 = vmatpush1.msra.mxu0 0.0
    %192 = vmatprep.subr.mxu0 0.0
    %193 = vmatpush1.msra.mxu0 0.0
    %194 = vmatprep.subr.mxu0 0.0
    %195 = vmatpush1.msra.mxu0 0.0
    %196 = vmatprep.subr.mxu0 0.0
    %197 = vmatpush1.msra.mxu0 0.0
    %198 = vmatprep.subr.mxu0 0.0
    %199 = vmatpush1.msra.mxu0 0.0
    %200 = vmatprep.subr.mxu0 0.0
    %201 = vmatpush1.msra.mxu0 0.0
    %202 = vmatprep.mubr.f32.mxu0 0.0
    %203 = vmatmul.mubr.f32.gmra.mrb[0].mxu0 %v132
    %v204 = vpop.f32.mrb[0].mxu0
    %v205 = vadd.f32 %v128, %v204
    %v206 = vpop.f32.mrb[0].mxu0
    %207 = vdwg.mxu0
    %208 = vst [vmem:[#allocation5] sm:$0x3] %v205
    // Predicated region
    $region26: #{tpu_custom_call.1} parent=1 // pred_check
      _
    $region27: #{tpu_custom_call.1} parent=1 // pred_check_branch
      %210 = sbr.rel (0) target = $region29
    $region28: #{tpu_custom_call.1} parent=1 // pred_region
      %s212 = ssub.s32 32, 32
      %213 = vsyncadd [#allocation4], %s212
      %s215 = sshll.u32 [#allocation5], 4
      %s216 = int_to_ptr.vmem [resolvable:$true] %s215
      %218 = dma.vmem_to_hbm [thread:$0]  %s216, 32, %s5, [#allocation4]
    $region29: #{tpu_custom_call.1} parent=1 // pred_fallthru
      _
    // Predicated region
    $region30: #{tpu_custom_call.1} parent=1 // pred_check
      _
    $region31: #{tpu_custom_call.1} parent=1 // pred_check_branch
      %220 = sbr.rel (0) target = $region33
    $region32: #{tpu_custom_call.1} parent=1 // pred_region
      %221 = dma.done [#allocation4], 32
    $region33: #{tpu_custom_call.1} parent=1 // pred_fallthru
      _
    %222 = vsyncpa [#allocation3], 1
    %223 = vsyncpa [#allocation4], 1

</llo_original>
